<compile_context>
chip_gen: v7x
topology: tpu7x:2x2x1
jax: 0.10.0
libtpu: 0.0.40
codegen_flags: <defaults>
</compile_context>

<pallas_src>
import math

import jax
import jax.numpy as jnp
from jax.experimental import pallas as pl
from jax.experimental.pallas import tpu as pltpu


def make_pe_table(d_model: int, max_len: int) -> jnp.ndarray:
    """Deterministic sinusoidal table, identical to PositionalEncoding.__init__."""
    position = jnp.arange(0, max_len, dtype=jnp.float32)[:, None]          # (L, 1)
    div_term = jnp.exp(
        jnp.arange(0, d_model, 2, dtype=jnp.float32)
        * (-(math.log(10000.0) / d_model))
    )                                                                       # (D/2,)
    angles = position * div_term                                            # (L, D/2)
    pe = jnp.zeros((max_len, d_model), dtype=jnp.float32)
    pe = pe.at[:, 0::2].set(jnp.sin(angles))
    pe = pe.at[:, 1::2].set(jnp.cos(angles))
    return pe[None, :, :]                                                   # (1, L, D)


# ~1 MiB per block: already ~85% of HBM roofline when pipelined, and small
# enough that 2 bufs/input + 2 bufs/output fit the scoped-VMEM default on all
# of v5e / v6e / v7x.
_TARGET_BLOCK_BYTES = 1 << 20


def _scale_kernel(x_ref, o_ref, *, xscale):
    # Pure VPU elementwise: o = x * sqrt(d_model).  f32 math so bf16 inputs
    # behave on v5e; for f32 inputs the casts are no-ops.
    o_ref[...] = (x_ref[...].astype(jnp.float32) * xscale).astype(o_ref.dtype)


def _scale_lane_dense(x2: jnp.ndarray, xscale: float) -> jnp.ndarray:
    """Scale a 2-D (rows, lanes) slab; lanes is a multiple of 128 (unmasked vst)."""
    rows, lanes = x2.shape
    itemsize = jnp.dtype(x2.dtype).itemsize
    target_rows = max(1, _TARGET_BLOCK_BYTES // (lanes * itemsize))
    if target_rows >= rows:
        tile_rows = rows                      # full extent: always legal
    else:
        tile_rows = max(8, (target_rows // 8) * 8)   # keep sublane multiple of 8

    kernel = lambda x_ref, o_ref: _scale_kernel(x_ref, o_ref, xscale=xscale)
    return pl.pallas_call(
        kernel,
        out_shape=jax.ShapeDtypeStruct((rows, lanes), x2.dtype),
        grid=(pl.cdiv(rows, tile_rows),),
        in_specs=[pl.BlockSpec((tile_rows, lanes), lambda i: (i, 0))],
        out_specs=pl.BlockSpec((tile_rows, lanes), lambda i: (i, 0)),
        compiler_params=pltpu.CompilerParams(
            dimension_semantics=("parallel",)),
    )(x2)


def _scale_3d(x: jnp.ndarray, xscale: float) -> jnp.ndarray:
    """Fallback: tile over (batch, time) keeping full d_model as the lane dim."""
    b, t, d = x.shape
    itemsize = jnp.dtype(x.dtype).itemsize
    max_rows = max(1, _TARGET_BLOCK_BYTES // (d * itemsize))
    if max_rows >= t:
        tile_t = t                            # full extent along time
    else:
        tile_t = max(8, (max_rows // 8) * 8)  # multiple of 8 sublanes

    kernel = lambda x_ref, o_ref: _scale_kernel(x_ref, o_ref, xscale=xscale)
    return pl.pallas_call(
        kernel,
        out_shape=jax.ShapeDtypeStruct((b, t, d), x.dtype),
        grid=(b, pl.cdiv(t, tile_t)),
        in_specs=[pl.BlockSpec((1, tile_t, d), lambda bi, ti: (bi, ti, 0))],
        out_specs=pl.BlockSpec((1, tile_t, d), lambda bi, ti: (bi, ti, 0)),
        compiler_params=pltpu.CompilerParams(
            dimension_semantics=("parallel", "parallel")),
    )(x)


def rel_positional_encoding(x: jnp.ndarray, pe: jnp.ndarray):
    """Forward of RelPositionalEncoding.

    Args:
      x:  (batch, time, d_model)
      pe: (1, max_len, d_model) precomputed sinusoidal table

    Returns:
      (x * sqrt(d_model), pe[:, :time, :])
    """
    b, t, d = x.shape
    _, max_len, d_pe = pe.shape
    assert d == d_pe
    # Table supports sequences up to max_len (relaxes the original `<` which
    # needlessly rejected t == max_len).
    assert t <= max_len, "sequence length must be <= max_len"
    xscale = math.sqrt(d)

    # pos_emb is a pure slice of the table: no compute, so it is returned from
    # the wrapper instead of being copied HBM->VMEM->HBM through the kernel.
    pos_emb = pe[:, :t, :]

    n = b * t * d
    if n % 128 == 0:
        # Lane-dense path: fold x into (rows, lanes) with lanes a multiple of
        # 128 so the output stores are unmasked.  Elementwise scale commutes
        # with the reshape, so this is pure layout plumbing.
        lanes = 128
        while lanes < 1024 and n % (lanes * 2) == 0 and (n // (lanes * 2)) >= 8:
            lanes *= 2
        rows = n // lanes
        x_out = _scale_lane_dense(x.reshape(rows, lanes), xscale).reshape(b, t, d)
    else:
        x_out = _scale_3d(x, xscale)

    # NOTE: input_output_aliases={0: 0} (x -> x_out) would be a small free win
    # if the caller never reuses x; omitted here because the demo re-reads x.
    return x_out, pos_emb


if __name__ == "__main__":
    batch, time, d_model, max_len = 2, 8, 32, 64

    key = jax.random.PRNGKey(0)
    x = jax.random.normal(key, (batch, time, d_model), dtype=jnp.float32)

    pe = make_pe_table(d_model, max_len)

    x_out, pos_emb = rel_positional_encoding(x, pe)
    jax.block_until_ready((x_out, pos_emb))

    # Reference check (pure JAX)
    x_ref = x * math.sqrt(d_model)
    pos_ref = pe[:, :time, :]
    assert x_out.shape == (batch, time, d_model)
    assert pos_emb.shape == (1, time, d_model)
    assert jnp.allclose(x_out, x_ref, atol=1e-6)
    assert jnp.allclose(pos_emb, pos_ref, atol=1e-6)

    print("KERNEL_OK")
</pallas_src>

<mosaic_0001>
module attributes {stable_mosaic.version = 11 : i64} {
  func.func @_lambda_(%arg0: i32, %arg1: memref<4x128xf32, #tpu.memory_space<vmem>>, %arg2: memref<4x128xf32, #tpu.memory_space<vmem>>) attributes {dimension_semantics = [#tpu.dimension_semantics<parallel>], iteration_bounds = array<i64: 1>, scalar_prefetch = 0 : i64, scratch_operands = 0 : i64, tpu.core_type = #tpu.core_type<tc>, window_params = [{transform_indices = @transform_0, window_bounds = array<i64: 4, 128>}, {transform_indices = @transform_1, window_bounds = array<i64: 4, 128>}]} {
    %c0 = arith.constant 0 : index
    %c0_0 = arith.constant 0 : index
    %0 = vector.load %arg1[%c0, %c0_0] : memref<4x128xf32, #tpu.memory_space<vmem>>, vector<4x128xf32>
    %cst = arith.constant 5.65685415 : f32
    %1 = vector.broadcast %cst : f32 to vector<4x128xf32>
    %2 = arith.mulf %0, %1 : vector<4x128xf32>
    %c0_1 = arith.constant 0 : index
    %c0_2 = arith.constant 0 : index
    %3 = vector.load %arg2[%c0_1, %c0_2] : memref<4x128xf32, #tpu.memory_space<vmem>>, vector<4x128xf32>
    tpu.vector_store %arg2[%c0_1, %c0_2], %2 {strides = array<i32>} : memref<4x128xf32, #tpu.memory_space<vmem>>, vector<4x128xf32>,
    return
  }
  func.func @transform_0(%arg0: i32) -> (i32, i32) {
    %c0_i32 = arith.constant 0 : i32
    %c0_i32_0 = arith.constant 0 : i32
    return %arg0, %c0_i32 : i32, i32
  }
  func.func @transform_1(%arg0: i32) -> (i32, i32) {
    %c0_i32 = arith.constant 0 : i32
    %c0_i32_0 = arith.constant 0 : i32
    return %arg0, %c0_i32 : i32, i32
  }
}

</mosaic_0001>

<llo_original>
// kernel: tpu_custom_call.1
$region0: #{tpu_custom_call.1}
  #allocation0 [shape = 'u32[]', space=smem, size = 0x4, offset = 0x4, fixed_abs, tag = 'smem constant byte address 0x4 - core index']
  #allocation1 [shape = 'u32[144,128]{1,0:T(1,128)}', space=vmem, size = 0x12000, scoped, tag = 'internal scratch']
  %s0 = inlined_call_operand.hbm [shape: f32[4,128], index: 0, kind: input, shape index: {}]
  %s1 = inlined_call_operand.hbm [shape: f32[4,128], index: 1, kind: output, shape index: {}]
  %s2 = sld [smem:[#allocation0]]
  $region18: #{tpu_custom_call.1} parent=0
    _
  %s4 = ssub.s32 1, %s2
  %s5 = scalar_select 0, %s4, %s2
  $region1: #{tpu_custom_call.1} parent=0
    #allocation2 [shape = 'u8[2048]{0}', space=vmem, size = 0x800, scoped, tag = 'input window, operand 0, single buffered']
    #allocation3 [shape = 's32[1]{0}', space=sflag, size = 0x4, scoped, tag = 'scoped memory for tpu_custom_call.1']
    #allocation4 [shape = 's32[1]{0}', space=sflag, size = 0x4, scoped, tag = 'scoped memory for tpu_custom_call.1']
    #allocation5 [shape = 'u8[2048]{0}', space=vmem, size = 0x800, scoped, tag = 'output window, operand 0, single buffered']
    %6 = vsyncpa [#allocation3], 0
    %7 = vsyncpa [#allocation4], 0
    // Predicated region
    $region2: #{tpu_custom_call.1} parent=1 // pred_check
      _
    $region3: #{tpu_custom_call.1} parent=1 // pred_check_branch
      %9 = sbr.rel (0) target = $region5
    $region4: #{tpu_custom_call.1} parent=1 // pred_region
      %s11 = ssub.s32 64, 64
      %12 = vsyncadd [#allocation3], %s11
      %s14 = sshll.u32 [#allocation2], 4
      %s15 = int_to_ptr.vmem [resolvable:$true] %s14
      %17 = dma.hbm_to_vmem [thread:$0]  %s0, 64, %s15, [#allocation3]
    $region5: #{tpu_custom_call.1} parent=1 // pred_fallthru
      _
    // Predicated region
    $region6: #{tpu_custom_call.1} parent=1 // pred_check
      _
    $region7: #{tpu_custom_call.1} parent=1 // pred_check_branch
      %19 = sbr.rel (0) target = $region9
    $region8: #{tpu_custom_call.1} parent=1 // pred_region
      %20 = dma.done [#allocation3], 64
    $region9: #{tpu_custom_call.1} parent=1 // pred_fallthru
      _
    %v21 = vld [vmem:[#allocation2] sm:$0xf]
    %v22 = vmul.f32 %v21, 5.656854
    %23 = vst [vmem:[#allocation5] sm:$0xf] %v22
    // Predicated region
    $region10: #{tpu_custom_call.1} parent=1 // pred_check
      _
    $region11: #{tpu_custom_call.1} parent=1 // pred_check_branch
      %25 = sbr.rel (0) target = $region13
    $region12: #{tpu_custom_call.1} parent=1 // pred_region
      %s27 = ssub.s32 64, 64
      %28 = vsyncadd [#allocation4], %s27
      %s30 = sshll.u32 [#allocation5], 4
      %s31 = int_to_ptr.vmem [resolvable:$true] %s30
      %33 = dma.vmem_to_hbm [thread:$0]  %s31, 64, %s1, [#allocation4]
    $region13: #{tpu_custom_call.1} parent=1 // pred_fallthru
      _
    // Predicated region
    $region14: #{tpu_custom_call.1} parent=1 // pred_check
      _
    $region15: #{tpu_custom_call.1} parent=1 // pred_check_branch
      %35 = sbr.rel (0) target = $region17
    $region16: #{tpu_custom_call.1} parent=1 // pred_region
      %36 = dma.done [#allocation4], 64
    $region17: #{tpu_custom_call.1} parent=1 // pred_fallthru
      _
    %37 = vsyncpa [#allocation3], 1
    %38 = vsyncpa [#allocation4], 1

</llo_original>
